<compile_context>
chip_gen: v7x
topology: tpu7x:2x2x1
jax: 0.10.0
libtpu: 0.0.40
codegen_flags: <defaults>
</compile_context>

<pallas_src>
import jax
import jax.numpy as jnp
from jax.experimental import pallas as pl
from jax.experimental.pallas import tpu as pltpu


def _round_up(x, m):
    return ((x + m - 1) // m) * m


def _batch_tile(B, block_b):
    """Rows per grid step.

    16-aligned (safe packing for bf16 output tiles), aims for >=2 grid steps so the
    'parallel' batch axis can split across v7x's two TensorCores, and collapses to a
    single full-array block for tiny batches (full-array blocks are always legal).
    """
    block_b = max(16, _round_up(block_b, 16))
    tm = min(block_b, max(16, _round_up(pl.cdiv(B, 2), 16)))
    if tm >= B:
        tm = B  # single block == full array dims -> no alignment constraint
    return tm


# --------------------------------------------------------------------------- #
# Single-network forward:  out = relu(x @ W1 + b1) @ W2 + b2
# --------------------------------------------------------------------------- #
def rnd_mlp_kernel(x_ref, w1_ref, b1_ref, w2_ref, b2_ref, o_ref):
    x = x_ref[...].astype(jnp.bfloat16)          # in-kernel cast (free on mem-bound path)
    h = jnp.dot(x, w1_ref[...], preferred_element_type=jnp.float32)
    h = jnp.maximum(h + b1_ref[...], 0.0)        # f32 epilogue (v5e VPU has no bf16)
    o = jnp.dot(h.astype(w2_ref.dtype), w2_ref[...],
                preferred_element_type=jnp.float32)
    o_ref[...] = (o + b2_ref[...]).astype(o_ref.dtype)


def rnd_network_forward(x, w1, b1, w2, b2, *, block_b=2048, out_dtype=jnp.bfloat16):
    """Fused forward of the RND MLP.

    x:  (B, Din) float32
    w1: (Din, H)  (transposed vs. PyTorch nn.Linear weight)
    b1: (H,)
    w2: (H, Dout)
    b2: (Dout,)
    Returns (B, Dout) in `out_dtype` (bf16 by default; pass jnp.float32 if needed).
    """
    B, Din = x.shape
    H = w1.shape[1]
    Dout = w2.shape[1]

    w1_bf = w1.astype(jnp.bfloat16)
    w2_bf = w2.astype(jnp.bfloat16)
    b1_2d = b1.reshape(1, H).astype(jnp.float32)
    b2_2d = b2.reshape(1, Dout).astype(jnp.float32)

    tm = _batch_tile(B, block_b)
    grid = (pl.cdiv(B, tm),)

    out_bytes = jnp.dtype(out_dtype).itemsize
    cost = pl.CostEstimate(
        flops=2 * B * (Din * H + H * Dout),
        transcendentals=0,
        bytes_accessed=(B * Din * 4                      # x (f32, read once in-kernel)
                        + (Din * H + H * Dout) * 2       # weights (bf16, resident)
                        + (H + Dout) * 4                 # biases (f32, resident)
                        + B * Dout * out_bytes),         # output
    )

    return pl.pallas_call(
        rnd_mlp_kernel,
        out_shape=jax.ShapeDtypeStruct((B, Dout), out_dtype),
        grid=grid,
        in_specs=[
            pl.BlockSpec((tm, Din), lambda i: (i, 0)),   # x: streamed per tile
            pl.BlockSpec((Din, H), lambda i: (0, 0)),    # W1: resident
            pl.BlockSpec((1, H), lambda i: (0, 0)),      # b1: resident
            pl.BlockSpec((H, Dout), lambda i: (0, 0)),   # W2: resident
            pl.BlockSpec((1, Dout), lambda i: (0, 0)),   # b2: resident
        ],
        out_specs=pl.BlockSpec((tm, Dout), lambda i: (i, 0)),
        compiler_params=pltpu.CompilerParams(
            dimension_semantics=("parallel",),           # megacore split on v7x
        ),
        cost_estimate=cost,
    )(x.astype(jnp.float32), w1_bf, b1_2d, w2_bf, b2_2d)


# --------------------------------------------------------------------------- #
# Fully fused RND intrinsic reward:  r_i = mean_j (pred(x)_ij - target(x)_ij)^2
# Both (B, Dout) activations stay in VMEM; only (B, 1) f32 is written to HBM.
# --------------------------------------------------------------------------- #
def rnd_reward_kernel(x_ref,
                      pw1_ref, pb1_ref, pw2_ref, pb2_ref,
                      tw1_ref, tb1_ref, tw2_ref, tb2_ref,
                      r_ref):
    x = x_ref[...].astype(jnp.bfloat16)
    hp = jnp.maximum(
        jnp.dot(x, pw1_ref[...], preferred_element_type=jnp.float32) + pb1_ref[...], 0.0)
    op = jnp.dot(hp.astype(jnp.bfloat16), pw2_ref[...],
                 preferred_element_type=jnp.float32) + pb2_ref[...]
    ht = jnp.maximum(
        jnp.dot(x, tw1_ref[...], preferred_element_type=jnp.float32) + tb1_ref[...], 0.0)
    ot = jnp.dot(ht.astype(jnp.bfloat16), tw2_ref[...],
                 preferred_element_type=jnp.float32) + tb2_ref[...]
    d = op - ot
    r_ref[...] = jnp.mean(d * d, axis=-1, keepdims=True)


def rnd_intrinsic_reward(x, pred_params, target_params, *, block_b=2048):
    """Per-row MSE between predictor and target RND networks, fully fused.

    pred_params / target_params: (w1, b1, w2, b2) with w1:(Din,H), w2:(H,Dout).
    Returns (B,) float32.
    """
    B, Din = x.shape
    pw1, pb1, pw2, pb2 = pred_params
    tw1, tb1, tw2, tb2 = target_params
    H = pw1.shape[1]
    Dout = pw2.shape[1]

    def prep(w1, b1, w2, b2):
        return (w1.astype(jnp.bfloat16), b1.reshape(1, H).astype(jnp.float32),
                w2.astype(jnp.bfloat16), b2.reshape(1, Dout).astype(jnp.float32))

    pw1, pb1, pw2, pb2 = prep(pw1, pb1, pw2, pb2)
    tw1, tb1, tw2, tb2 = prep(tw1, tb1, tw2, tb2)

    tm = _batch_tile(B, block_b)
    grid = (pl.cdiv(B, tm),)

    cost = pl.CostEstimate(
        flops=2 * (2 * B * (Din * H + H * Dout)) + 3 * B * Dout,
        transcendentals=0,
        bytes_accessed=(B * Din * 4
                        + 2 * ((Din * H + H * Dout) * 2 + (H + Dout) * 4)
                        + B * 4),
    )

    weight_spec = lambda shape: pl.BlockSpec(shape, lambda i: (0, 0))
    out = pl.pallas_call(
        rnd_reward_kernel,
        out_shape=jax.ShapeDtypeStruct((B, 1), jnp.float32),
        grid=grid,
        in_specs=[
            pl.BlockSpec((tm, Din), lambda i: (i, 0)),
            weight_spec((Din, H)), weight_spec((1, H)),
            weight_spec((H, Dout)), weight_spec((1, Dout)),
            weight_spec((Din, H)), weight_spec((1, H)),
            weight_spec((H, Dout)), weight_spec((1, Dout)),
        ],
        out_specs=pl.BlockSpec((tm, 1), lambda i: (i, 0)),
        compiler_params=pltpu.CompilerParams(
            dimension_semantics=("parallel",),
        ),
        cost_estimate=cost,
    )(x.astype(jnp.float32), pw1, pb1, pw2, pb2, tw1, tb1, tw2, tb2)
    return out[:, 0]


# --------------------------------------------------------------------------- #
# Init + pure-JAX references
# --------------------------------------------------------------------------- #
def init_params(key, input_dim, hidden_dim=128, output_dim=128):
    """Matches PyTorch nn.Linear default init U(-1/sqrt(fan_in), 1/sqrt(fan_in))."""
    k1, k2, k3, k4 = jax.random.split(key, 4)
    bound1 = 1.0 / jnp.sqrt(input_dim)
    bound2 = 1.0 / jnp.sqrt(hidden_dim)
    w1 = jax.random.uniform(k1, (input_dim, hidden_dim), jnp.float32, -bound1, bound1)
    b1 = jax.random.uniform(k2, (hidden_dim,), jnp.float32, -bound1, bound1)
    w2 = jax.random.uniform(k3, (hidden_dim, output_dim), jnp.float32, -bound2, bound2)
    b2 = jax.random.uniform(k4, (output_dim,), jnp.float32, -bound2, bound2)
    return w1, b1, w2, b2


def _ref_forward(x, w1, b1, w2, b2):
    return jnp.maximum(x @ w1 + b1, 0.0) @ w2 + b2


if __name__ == "__main__":
    key = jax.random.PRNGKey(0)
    k_in, k_pred, k_targ, k_in2 = jax.random.split(key, 4)

    B, INPUT_DIM, HIDDEN_DIM, OUTPUT_DIM = 8, 16, 128, 128
    pred = init_params(k_pred, INPUT_DIM, HIDDEN_DIM, OUTPUT_DIM)
    targ = init_params(k_targ, INPUT_DIM, HIDDEN_DIM, OUTPUT_DIM)

    # --- Test 1: small batch, single grid step, bf16 output (default) -------
    x = jax.random.normal(k_in, (B, INPUT_DIM), jnp.float32)
    out = jax.block_until_ready(rnd_network_forward(x, *pred))
    ref = _ref_forward(x, *pred)
    assert out.shape == (B, OUTPUT_DIM) and out.dtype == jnp.bfloat16
    err = float(jnp.max(jnp.abs(out.astype(jnp.float32) - ref)))
    assert jnp.allclose(out.astype(jnp.float32), ref, atol=5e-2, rtol=5e-2), err

    # --- Test 2: non-divisible batch, ragged grid (no pad / no slice), f32 out
    B2 = 300
    x2 = jax.random.normal(k_in2, (B2, INPUT_DIM), jnp.float32)
    out2 = jax.block_until_ready(
        rnd_network_forward(x2, *pred, block_b=128, out_dtype=jnp.float32))
    ref2 = _ref_forward(x2, *pred)
    assert out2.shape == (B2, OUTPUT_DIM) and out2.dtype == jnp.float32
    err2 = float(jnp.max(jnp.abs(out2 - ref2)))
    assert jnp.allclose(out2, ref2, atol=5e-2, rtol=5e-2), err2

    # --- Test 3: fully fused predictor + target + per-row MSE ---------------
    r = jax.block_until_ready(rnd_intrinsic_reward(x2, pred, targ, block_b=128))
    r_ref = jnp.mean((_ref_forward(x2, *pred) - _ref_forward(x2, *targ)) ** 2, axis=-1)
    assert r.shape == (B2,)
    err3 = float(jnp.max(jnp.abs(r - r_ref)))
    assert jnp.allclose(r, r_ref, atol=5e-2, rtol=5e-2), err3

    print("KERNEL_OK")
</pallas_src>

<mosaic_0001>
module attributes {stable_mosaic.version = 11 : i64} {
  func.func @rnd_mlp_kernel(%arg0: i32, %arg1: memref<8x16xf32, #tpu.memory_space<vmem>>, %arg2: memref<16x128xbf16, #tpu.memory_space<vmem>>, %arg3: memref<1x128xf32, #tpu.memory_space<vmem>>, %arg4: memref<128x128xbf16, #tpu.memory_space<vmem>>, %arg5: memref<1x128xf32, #tpu.memory_space<vmem>>, %arg6: memref<8x128xbf16, #tpu.memory_space<vmem>>) attributes {dimension_semantics = [#tpu.dimension_semantics<parallel>], iteration_bounds = array<i64: 1>, scalar_prefetch = 0 : i64, scratch_operands = 0 : i64, tpu.core_type = #tpu.core_type<tc>, window_params = [{transform_indices = @transform_0, window_bounds = array<i64: 8, 16>}, {pipeline_mode = #tpu.pipeline_mode<synchronous>, transform_indices = @transform_1, window_bounds = array<i64: 16, 128>}, {pipeline_mode = #tpu.pipeline_mode<synchronous>, transform_indices = @transform_2, window_bounds = array<i64: 1, 128>}, {pipeline_mode = #tpu.pipeline_mode<synchronous>, transform_indices = @transform_3, window_bounds = array<i64: 128, 128>}, {pipeline_mode = #tpu.pipeline_mode<synchronous>, transform_indices = @transform_4, window_bounds = array<i64: 1, 128>}, {transform_indices = @transform_5, window_bounds = array<i64: 8, 128>}]} {
    %c0 = arith.constant 0 : index
    %c0_0 = arith.constant 0 : index
    %0 = vector.load %arg1[%c0, %c0_0] : memref<8x16xf32, #tpu.memory_space<vmem>>, vector<8x16xf32>
    %1 = arith.truncf %0 : vector<8x16xf32> to vector<8x16xbf16>
    %c0_1 = arith.constant 0 : index
    %c0_2 = arith.constant 0 : index
    %2 = vector.load %arg2[%c0_1, %c0_2] : memref<16x128xbf16, #tpu.memory_space<vmem>>, vector<16x128xbf16>
    %cst = arith.constant dense<0.000000e+00> : vector<8x128xf32>
    %3 = tpu.matmul %1, %2, %cst {dimension_numbers = #tpu.dot_dimension_numbers<[1], [0], [0], [1], [0, 0, 1, 1], [], []>} : vector<8x16xbf16>, vector<16x128xbf16>, vector<8x128xf32> -> vector<8x128xf32>
    %c0_3 = arith.constant 0 : index
    %c0_4 = arith.constant 0 : index
    %4 = vector.load %arg3[%c0_3, %c0_4] : memref<1x128xf32, #tpu.memory_space<vmem>>, vector<1x128xf32>
    %5 = vector.broadcast %4 : vector<1x128xf32> to vector<8x128xf32>
    %6 = arith.addf %3, %5 : vector<8x128xf32>
    %cst_5 = arith.constant 0.000000e+00 : f32
    %7 = vector.broadcast %cst_5 : f32 to vector<8x128xf32>
    %8 = arith.maximumf %6, %7 : vector<8x128xf32>
    %9 = arith.truncf %8 : vector<8x128xf32> to vector<8x128xbf16>
    %c0_6 = arith.constant 0 : index
    %c0_7 = arith.constant 0 : index
    %10 = vector.load %arg4[%c0_6, %c0_7] : memref<128x128xbf16, #tpu.memory_space<vmem>>, vector<128x128xbf16>
    %cst_8 = arith.constant dense<0.000000e+00> : vector<8x128xf32>
    %11 = tpu.matmul %9, %10, %cst_8 {dimension_numbers = #tpu.dot_dimension_numbers<[1], [0], [0], [1], [0, 0, 1, 1], [], []>} : vector<8x128xbf16>, vector<128x128xbf16>, vector<8x128xf32> -> vector<8x128xf32>
    %c0_9 = arith.constant 0 : index
    %c0_10 = arith.constant 0 : index
    %12 = vector.load %arg5[%c0_9, %c0_10] : memref<1x128xf32, #tpu.memory_space<vmem>>, vector<1x128xf32>
    %13 = vector.broadcast %12 : vector<1x128xf32> to vector<8x128xf32>
    %14 = arith.addf %11, %13 : vector<8x128xf32>
    %15 = arith.truncf %14 : vector<8x128xf32> to vector<8x128xbf16>
    %c0_11 = arith.constant 0 : index
    %c0_12 = arith.constant 0 : index
    %16 = vector.load %arg6[%c0_11, %c0_12] : memref<8x128xbf16, #tpu.memory_space<vmem>>, vector<8x128xbf16>
    tpu.vector_store %arg6[%c0_11, %c0_12], %15 {strides = array<i32>} : memref<8x128xbf16, #tpu.memory_space<vmem>>, vector<8x128xbf16>,
    return
  }
  func.func @transform_0(%arg0: i32) -> (i32, i32) {
    %c0_i32 = arith.constant 0 : i32
    %c0_i32_0 = arith.constant 0 : i32
    return %arg0, %c0_i32 : i32, i32
  }
  func.func @transform_1(%arg0: i32) -> (i32, i32) {
    %c0_i32 = arith.constant 0 : i32
    %c0_i32_0 = arith.constant 0 : i32
    %c0_i32_1 = arith.constant 0 : i32
    return %c0_i32, %c0_i32_0 : i32, i32
  }
  func.func @transform_2(%arg0: i32) -> (i32, i32) {
    %c0_i32 = arith.constant 0 : i32
    %c0_i32_0 = arith.constant 0 : i32
    %c0_i32_1 = arith.constant 0 : i32
    return %c0_i32, %c0_i32_0 : i32, i32
  }
  func.func @transform_3(%arg0: i32) -> (i32, i32) {
    %c0_i32 = arith.constant 0 : i32
    %c0_i32_0 = arith.constant 0 : i32
    %c0_i32_1 = arith.constant 0 : i32
    return %c0_i32, %c0_i32_0 : i32, i32
  }
  func.func @transform_4(%arg0: i32) -> (i32, i32) {
    %c0_i32 = arith.constant 0 : i32
    %c0_i32_0 = arith.constant 0 : i32
    %c0_i32_1 = arith.constant 0 : i32
    return %c0_i32, %c0_i32_0 : i32, i32
  }
  func.func @transform_5(%arg0: i32) -> (i32, i32) {
    %c0_i32 = arith.constant 0 : i32
    %c0_i32_0 = arith.constant 0 : i32
    return %arg0, %c0_i32 : i32, i32
  }
}

</mosaic_0001>

<llo_original>
// kernel: tpu_custom_call.1
$region0: #{tpu_custom_call.1}
  #allocation0 [shape = 'u32[]', space=smem, size = 0x4, offset = 0x4, fixed_abs, tag = 'smem constant byte address 0x4 - core index']
  #allocation1 [shape = 'u32[144,128]{1,0:T(1,128)}', space=vmem, size = 0x12000, scoped, tag = 'internal scratch']
  %s0 = inlined_call_operand.hbm [shape: f32[8,16], index: 0, kind: input, shape index: {}]
  %s1 = inlined_call_operand.hbm [shape: bf16[16,128], index: 1, kind: input, shape index: {}]
  %s2 = inlined_call_operand.vmem [shape: f32[1,128], index: 2, kind: input, shape index: {}]
  %s3 = inlined_call_operand.hbm [shape: bf16[128,128], index: 3, kind: input, shape index: {}]
  %s4 = inlined_call_operand.vmem [shape: f32[1,128], index: 4, kind: input, shape index: {}]
  %s5 = inlined_call_operand.hbm [shape: bf16[8,128], index: 5, kind: output, shape index: {}]
  %s6 = sld [smem:[#allocation0]]
  $region42: #{tpu_custom_call.1} parent=0
    _
  %s8 = ssub.s32 1, %s6
  %s9 = scalar_select 0, %s8, %s6
  $region1: #{tpu_custom_call.1} parent=0
    #allocation2 [shape = 'u8[4096]{0}', space=vmem, size = 0x1000, scoped, tag = 'input window, operand 0, single buffered']
    #allocation3 [shape = 's32[1]{0}', space=sflag, size = 0x4, scoped, tag = 'scoped memory for tpu_custom_call.1']
    #allocation4 [shape = 's32[1]{0}', space=sflag, size = 0x4, scoped, tag = 'scoped memory for tpu_custom_call.1']
    #allocation5 [shape = 'u8[4096]{0}', space=vmem, size = 0x1000, scoped, tag = 'input window, operand 1, single buffered']
    #allocation6 [shape = 's32[1]{0}', space=sflag, size = 0x4, scoped, tag = 'scoped memory for tpu_custom_call.1']
    #allocation7 [shape = 'u8[32768]{0}', space=vmem, size = 0x8000, scoped, tag = 'input window, operand 3, single buffered']
    #allocation8 [shape = 'u8[2048]{0}', space=vmem, size = 0x800, scoped, tag = 'output window, operand 0, single buffered']
    %10 = vsyncpa [#allocation3], 0
    %11 = vsyncpa [#allocation6], 0
    %12 = vsyncpa [#allocation4], 0
    // Predicated region
    $region2: #{tpu_custom_call.1} parent=1 // pred_check
      _
    $region3: #{tpu_custom_call.1} parent=1 // pred_check_branch
      %14 = sbr.rel (0) target = $region5
    $region4: #{tpu_custom_call.1} parent=1 // pred_region
      %s16 = ssub.s32 128, 128
      %17 = vsyncadd [#allocation3], %s16
      %s19 = sshll.u32 [#allocation2], 4
      %s20 = int_to_ptr.vmem [resolvable:$true] %s19
      %22 = dma.hbm_to_vmem [thread:$0]  %s0, 128, %s20, [#allocation3]
    $region5: #{tpu_custom_call.1} parent=1 // pred_fallthru
      _
    // Predicated region
    $region6: #{tpu_custom_call.1} parent=1 // pred_check
      _
    $region7: #{tpu_custom_call.1} parent=1 // pred_check_branch
      %24 = sbr.rel (0) target = $region9
    $region8: #{tpu_custom_call.1} parent=1 // pred_region
      %s26 = ssub.s32 128, 128
      %27 = vsyncadd [#allocation6], %s26
      %s28 = sshll.u32 [#allocation5], 4
      %s29 = int_to_ptr.vmem [resolvable:$true] %s28
      %34 = dma.hbm_to_vmem [thread:$0]  %s1, 128, %s29, [#allocation6], 64, 64, 4
    $region9: #{tpu_custom_call.1} parent=1 // pred_fallthru
      _
    // Predicated region
    $region10: #{tpu_custom_call.1} parent=1 // pred_check
      _
    $region11: #{tpu_custom_call.1} parent=1 // pred_check_branch
      %36 = sbr.rel (0) target = $region13
    $region12: #{tpu_custom_call.1} parent=1 // pred_region
      _
    $region13: #{tpu_custom_call.1} parent=1 // pred_fallthru
      _
    // Predicated region
    $region14: #{tpu_custom_call.1} parent=1 // pred_check
      _
    $region15: #{tpu_custom_call.1} parent=1 // pred_check_branch
      %38 = sbr.rel (0) target = $region17
    $region16: #{tpu_custom_call.1} parent=1 // pred_region
      %s40 = ssub.s32 1024, 1024
      %41 = vsyncadd [#allocation6], %s40
      %s42 = sshll.u32 [#allocation7], 4
      %s43 = int_to_ptr.vmem [resolvable:$true] %s42
      %48 = dma.hbm_to_vmem [thread:$0]  %s3, 1024, %s43, [#allocation6], 64, 64, 4
    $region17: #{tpu_custom_call.1} parent=1 // pred_fallthru
      _
    // Predicated region
    $region18: #{tpu_custom_call.1} parent=1 // pred_check
      _
    $region19: #{tpu_custom_call.1} parent=1 // pred_check_branch
      %50 = sbr.rel (0) target = $region21
    $region20: #{tpu_custom_call.1} parent=1 // pred_region
      _
    $region21: #{tpu_custom_call.1} parent=1 // pred_fallthru
      _
    // Predicated region
    $region22: #{tpu_custom_call.1} parent=1 // pred_check
      _
    $region23: #{tpu_custom_call.1} parent=1 // pred_check_branch
      %52 = sbr.rel (0) target = $region25
    $region24: #{tpu_custom_call.1} parent=1 // pred_region
      %53 = dma.done [#allocation3], 128
    $region25: #{tpu_custom_call.1} parent=1 // pred_fallthru
      _
    // Predicated region
    $region26: #{tpu_custom_call.1} parent=1 // pred_check
      _
    $region27: #{tpu_custom_call.1} parent=1 // pred_check_branch
      %55 = sbr.rel (0) target = $region29
    $region28: #{tpu_custom_call.1} parent=1 // pred_region
      %56 = dma.done [#allocation6], 128
    $region29: #{tpu_custom_call.1} parent=1 // pred_fallthru
      _
    // Predicated region
    $region30: #{tpu_custom_call.1} parent=1 // pred_check
      _
    $region31: #{tpu_custom_call.1} parent=1 // pred_check_branch
      %58 = sbr.rel (0) target = $region33
    $region32: #{tpu_custom_call.1} parent=1 // pred_region
      %59 = dma.done [#allocation6], 1024
    $region33: #{tpu_custom_call.1} parent=1 // pred_fallthru
      _
    %v61 = vld [vmem:[#allocation2] sm:$0xff]
    %v62 = vpack.c.bf16 %v61, %v61
    %v63 = vld [vmem:[#allocation5] sm:$0xf]
    %v64 = vld [vmem:[#allocation5 + $0x4] sm:$0xf]
    %v65 = vld [vmem:[%s2] sm:$0x1]
    %v67 = vlaneseq
    %v68 = vshrl.u32 %v67, 7
    %v69 = vsub.s32 0, %v68
    %v70 = vrot.slane %v65, %v69
    %v74 = vunpack.c.l.b16 %v63
    %v75 = vunpack.c.l.b16 %v64
    %v76 = vpack.c.b16 %v75, %v74
    %vm78 = vcmask 130048
    %v80 = vsel %vm78, %v62, 0
    %82 = vmatprep.subr.bf16.mxu0 0
    %83 = vmatpush1.bf16.msra.mxu0 %v76
    %84 = vmatprep.subr.bf16.mxu0 0
    %85 = vmatpush1.bf16.msra.mxu0 0
    %86 = vmatprep.subr.bf16.mxu0 0
    %87 = vmatpush1.bf16.msra.mxu0 0
    %88 = vmatprep.subr.bf16.mxu0 0
    %89 = vmatpush1.bf16.msra.mxu0 0
    %90 = vmatprep.subr.bf16.mxu0 0
    %91 = vmatpush1.bf16.msra.mxu0 0
    %92 = vmatprep.subr.bf16.mxu0 0
    %93 = vmatpush1.bf16.msra.mxu0 0
    %94 = vmatprep.subr.bf16.mxu0 0
    %95 = vmatpush1.bf16.msra.mxu0 0
    %96 = vmatprep.subr.bf16.mxu0 0
    %97 = vmatpush1.bf16.msra.mxu0 0
    %98 = vmatprep.subr.bf16.mxu0 0
    %99 = vmatpush1.bf16.msra.mxu0 0
    %100 = vmatprep.subr.bf16.mxu0 0
    %101 = vmatpush1.bf16.msra.mxu0 0
    %102 = vmatprep.subr.bf16.mxu0 0
    %103 = vmatpush1.bf16.msra.mxu0 0
    %104 = vmatprep.subr.bf16.mxu0 0
    %105 = vmatpush1.bf16.msra.mxu0 0
    %106 = vmatprep.subr.bf16.mxu0 0
    %107 = vmatpush1.bf16.msra.mxu0 0
    %108 = vmatprep.subr.bf16.mxu0 0
    %109 = vmatpush1.bf16.msra.mxu0 0
    %110 = vmatprep.subr.bf16.mxu0 0
    %111 = vmatpush1.bf16.msra.mxu0 0
    %112 = vmatprep.subr.bf16.mxu0 0
    %113 = vmatpush1.bf16.msra.mxu0 0
    %114 = vmatprep.mubr.bf16.mxu0 0
    %115 = vmatmul.mubr.bf16.gmra.mrb[0].mxu0 %v80
    %v116 = vpop.f32.mrb[0].mxu0
    %v117 = vadd.f32 %v70, %v116
    %v118 = vpop.f32.mrb[0].mxu0
    %v119 = vpop.f32.mrb[0].mxu0
    %v120 = vpop.f32.mrb[0].mxu0
    %121 = vdwg.mxu0
    %v122 = vmax.f32 %v117, 0.0
    %v123 = vpack.c.bf16 %v122, %v122
    %v124 = vld [vmem:[#allocation7] sm:$0xf]
    %v125 = vld [vmem:[#allocation7 + $0x4] sm:$0xf]
    %v126 = vld [vmem:[#allocation7 + $0x8] sm:$0xf]
    %v127 = vld [vmem:[#allocation7 + $0xc] sm:$0xf]
    %v128 = vld [vmem:[#allocation7 + $0x10] sm:$0xf]
    %v129 = vld [vmem:[#allocation7 + $0x14] sm:$0xf]
    %v130 = vld [vmem:[#allocation7 + $0x18] sm:$0xf]
    %v131 = vld [vmem:[#allocation7 + $0x1c] sm:$0xf]
    %v132 = vld [vmem:[#allocation7 + $0x20] sm:$0xf]
    %v133 = vld [vmem:[#allocation7 + $0x24] sm:$0xf]
    %v134 = vld [vmem:[#allocation7 + $0x28] sm:$0xf]
    %v135 = vld [vmem:[#allocation7 + $0x2c] sm:$0xf]
    %v136 = vld [vmem:[#allocation7 + $0x30] sm:$0xf]
    %v137 = vld [vmem:[#allocation7 + $0x34] sm:$0xf]
    %v138 = vld [vmem:[#allocation7 + $0x38] sm:$0xf]
    %v139 = vld [vmem:[#allocation7 + $0x3c] sm:$0xf]
    %v140 = vld [vmem:[%s4] sm:$0x1]
    %v142 = vlaneseq
    %v143 = vshrl.u32 %v142, 7
    %v144 = vsub.s32 0, %v143
    %v145 = vrot.slane %v140, %v144
    %v163 = vunpack.c.l.b16 %v124
    %v164 = vunpack.c.l.b16 %v125
    %v165 = vunpack.c.l.b16 %v126
    %v166 = vunpack.c.l.b16 %v127
    %v167 = vunpack.c.l.b16 %v128
    %v168 = vunpack.c.l.b16 %v129
    %v169 = vunpack.c.l.b16 %v130
    %v170 = vunpack.c.l.b16 %v131
    %v171 = vunpack.c.l.b16 %v132
    %v172 = vunpack.c.l.b16 %v133
    %v173 = vunpack.c.l.b16 %v134
    %v174 = vunpack.c.l.b16 %v135
    %v175 = vunpack.c.l.b16 %v136
    %v176 = vunpack.c.l.b16 %v137
    %v177 = vunpack.c.l.b16 %v138
    %v178 = vunpack.c.l.b16 %v139
    %v179 = vpack.c.b16 %v164, %v163
    %v180 = vpack.c.b16 %v166, %v165
    %v181 = vpack.c.b16 %v168, %v167
    %v182 = vpack.c.b16 %v170, %v169
    %v183 = vpack.c.b16 %v172, %v171
    %v184 = vpack.c.b16 %v174, %v173
    %v185 = vpack.c.b16 %v176, %v175
    %v186 = vpack.c.b16 %v178, %v177
    %195 = vmatprep.subr.bf16.mxu0 0
    %196 = vmatpush1.bf16.msra.mxu0 %v179
    %197 = vmatprep.subr.bf16.mxu0 0
    %198 = vmatpush1.bf16.msra.mxu0 %v180
    %199 = vmatprep.subr.bf16.mxu0 0
    %200 = vmatpush1.bf16.msra.mxu0 %v181
    %201 = vmatprep.subr.bf16.mxu0 0
    %202 = vmatpush1.bf16.msra.mxu0 %v182
    %203 = vmatprep.subr.bf16.mxu0 0
    %204 = vmatpush1.bf16.msra.mxu0 %v183
    %205 = vmatprep.subr.bf16.mxu0 0
    %206 = vmatpush1.bf16.msra.mxu0 %v184
    %207 = vmatprep.subr.bf16.mxu0 0
    %208 = vmatpush1.bf16.msra.mxu0 %v185
    %209 = vmatprep.subr.bf16.mxu0 0
    %210 = vmatpush1.bf16.msra.mxu0 %v186
    %211 = vmatprep.subr.bf16.mxu0 0
    %212 = vmatpush1.bf16.msra.mxu0 0
    %213 = vmatprep.subr.bf16.mxu0 0
    %214 = vmatpush1.bf16.msra.mxu0 0
    %215 = vmatprep.subr.bf16.mxu0 0
    %216 = vmatpush1.bf16.msra.mxu0 0
    %217 = vmatprep.subr.bf16.mxu0 0
    %218 = vmatpush1.bf16.msra.mxu0 0
    %219 = vmatprep.subr.bf16.mxu0 0
    %220 = vmatpush1.bf16.msra.mxu0 0
    %221 = vmatprep.subr.bf16.mxu0 0
    %222 = vmatpush1.bf16.msra.mxu0 0
    %223 = vmatprep.subr.bf16.mxu0 0
    %224 = vmatpush1.bf16.msra.mxu0 0
    %225 = vmatprep.subr.bf16.mxu0 0
    %226 = vmatpush1.bf16.msra.mxu0 0
    %227 = vmatprep.mubr.bf16.mxu0 0
    %228 = vmatmul.mubr.bf16.gmra.mrb[0].mxu0 %v123
    %v229 = vpop.f32.mrb[0].mxu0
    %v230 = vadd.f32 %v145, %v229
    %v231 = vpop.f32.mrb[0].mxu0
    %v232 = vpop.f32.mrb[0].mxu0
    %v233 = vpop.f32.mrb[0].mxu0
    %234 = vdwg.mxu0
    %v235 = vpack.c.bf16 %v230, %v230
    %236 = vst [vmem:[#allocation8] sm:$0xf] %v235
    // Predicated region
    $region34: #{tpu_custom_call.1} parent=1 // pred_check
      _
    $region35: #{tpu_custom_call.1} parent=1 // pred_check_branch
      %238 = sbr.rel (0) target = $region37
    $region36: #{tpu_custom_call.1} parent=1 // pred_region
      %s240 = ssub.s32 64, 64
      %241 = vsyncadd [#allocation4], %s240
      %s243 = sshll.u32 [#allocation8], 4
      %s244 = int_to_ptr.vmem [resolvable:$true] %s243
      %246 = dma.vmem_to_hbm [thread:$0]  %s244, 64, %s5, [#allocation4]
    $region37: #{tpu_custom_call.1} parent=1 // pred_fallthru
      _
    // Predicated region
    $region38: #{tpu_custom_call.1} parent=1 // pred_check
      _
    $region39: #{tpu_custom_call.1} parent=1 // pred_check_branch
      %248 = sbr.rel (0) target = $region41
    $region40: #{tpu_custom_call.1} parent=1 // pred_region
      %249 = dma.done [#allocation4], 64
    $region41: #{tpu_custom_call.1} parent=1 // pred_fallthru
      _
    %250 = vsyncpa [#allocation3], 1
    %251 = vsyncpa [#allocation6], 1
    %252 = vsyncpa [#allocation4], 1

</llo_original>
